<compile_context>
chip_gen: v7x
topology: tpu7x:2x2x1
jax: 0.10.0
libtpu: 0.0.40
codegen_flags: <defaults>
</compile_context>

<pallas_src>
import jax
import jax.numpy as jnp
from jax.experimental import pallas as pl
from jax.experimental.pallas import tpu as pltpu


def _pos_add_kernel(x_ref, pos_ref, o_ref):
    # x_ref:   (B, tile_f) block of the flattened input
    # pos_ref: (1, tile_f) block of the flattened positional table (broadcast
    #          over the batch/sublane axis)
    # o_ref:   (B, tile_f) output block
    o_ref[...] = x_ref[...] + pos_ref[...]


def _round_up(n: int, m: int) -> int:
    return ((n + m - 1) // m) * m


def positional_embedding_1d(
    x: jax.Array,
    pos_embedding: jax.Array,
    *,
    target_block_bytes: int = 1 << 20,  # ~1 MiB per x block
) -> jax.Array:
    """x: (B, S, D), pos_embedding: (1, S, D) -> (B, S, D)."""
    B, S, D = x.shape
    assert pos_embedding.shape == (1, S, D)
    pos_embedding = pos_embedding.astype(x.dtype)

    N = S * D
    itemsize = jnp.dtype(x.dtype).itemsize

    # Lane-dense flattened layout: (B, S*D) and (1, S*D). Reshape is contiguous
    # (free); the elementwise add is layout-agnostic so semantics are unchanged.
    x2 = x.reshape(B, N)
    p2 = pos_embedding.reshape(1, N)

    # Lane-tile: multiple of 128 lanes, sized so one x block is ~target bytes.
    tile_f = max(128, (target_block_bytes // max(1, B * itemsize)) // 128 * 128)
    tile_f = min(tile_f, _round_up(N, 128))

    # Pad the flattened axis so the grid divides evenly (sliced off afterwards).
    Np = _round_up(N, tile_f)
    if Np != N:
        pad = Np - N
        x2 = jnp.pad(x2, ((0, 0), (0, pad)))
        p2 = jnp.pad(p2, ((0, 0), (0, pad)))

    n_tiles = Np // tile_f

    # VMEM: double-buffered x + out ((B, tile_f) each) and pos ((1, tile_f)).
    per_step_bytes = (2 * B + 1) * tile_f * itemsize
    vmem_limit = int(min(64 << 20, max(4 << 20, 2 * per_step_bytes + (1 << 20))))

    cost = pl.CostEstimate(
        flops=B * N,
        transcendentals=0,
        bytes_accessed=(2 * B * N + N) * itemsize,
    )

    out2 = pl.pallas_call(
        _pos_add_kernel,
        out_shape=jax.ShapeDtypeStruct((B, Np), x.dtype),
        grid_spec=pltpu.PrefetchScalarGridSpec(
            num_scalar_prefetch=0,
            grid=(n_tiles,),
            in_specs=[
                # whole batch per step, one lane-tile of the flattened axis
                pl.BlockSpec((B, tile_f), lambda f: (0, f)),
                # matching lane-tile of the positional table (read once total)
                pl.BlockSpec((1, tile_f), lambda f: (0, f)),
            ],
            out_specs=pl.BlockSpec((B, tile_f), lambda f: (0, f)),
        ),
        compiler_params=pltpu.CompilerParams(
            dimension_semantics=("parallel",),
            vmem_limit_bytes=vmem_limit,
        ),
        cost_estimate=cost,
    )(x2, p2)

    if Np != N:
        out2 = out2[:, :N]
    return out2.reshape(B, S, D)


if __name__ == "__main__":
    batch, seq_len, dim = 2, 8, 32

    key = jax.random.PRNGKey(0)
    kx, kp = jax.random.split(key)

    x = jax.random.normal(kx, (batch, seq_len, dim), dtype=jnp.float32)
    # nn.Parameter(torch.zeros(1, seq_len, dim)) is zero-init; use a non-trivial
    # value too so the add is actually exercised.
    pos_embedding = jax.random.normal(kp, (1, seq_len, dim), dtype=jnp.float32)

    out = jax.block_until_ready(positional_embedding_1d(x, pos_embedding))

    ref = x + pos_embedding  # pure-JAX reference
    assert out.shape == (batch, seq_len, dim)
    assert jnp.allclose(out, ref, atol=1e-6), "mismatch vs reference"

    # Exact __init__ semantics: zero pos_embedding -> identity.
    out_zero = jax.block_until_ready(
        positional_embedding_1d(x, jnp.zeros((1, seq_len, dim), jnp.float32))
    )
    assert jnp.allclose(out_zero, x, atol=0.0)

    # Also exercise a shape whose S*D is not a multiple of the tile (padding path)
    # and a bf16 input (dtype preserved end-to-end).
    xb = jax.random.normal(kx, (4, 7, 48), dtype=jnp.bfloat16)
    pb = jax.random.normal(kp, (1, 7, 48), dtype=jnp.bfloat16)
    outb = jax.block_until_ready(positional_embedding_1d(xb, pb))
    assert outb.dtype == jnp.bfloat16
    assert jnp.allclose(outb.astype(jnp.float32), (xb + pb).astype(jnp.float32),
                        atol=1e-2)

    print("KERNEL_OK")
</pallas_src>

<mosaic_0001>
module attributes {stable_mosaic.version = 11 : i64} {
  func.func @_pos_add_kernel(%arg0: i32, %arg1: memref<2x256xf32, #tpu.memory_space<vmem>>, %arg2: memref<1x256xf32, #tpu.memory_space<vmem>>, %arg3: memref<2x256xf32, #tpu.memory_space<vmem>>) attributes {dimension_semantics = [#tpu.dimension_semantics<parallel>], iteration_bounds = array<i64: 1>, scalar_prefetch = 0 : i64, scratch_operands = 0 : i64, tpu.core_type = #tpu.core_type<tc>, window_params = [{transform_indices = @transform_0, window_bounds = array<i64: 2, 256>}, {transform_indices = @transform_1, window_bounds = array<i64: 1, 256>}, {transform_indices = @transform_2, window_bounds = array<i64: 2, 256>}]} {
    %c0 = arith.constant 0 : index
    %c0_0 = arith.constant 0 : index
    %0 = vector.load %arg1[%c0, %c0_0] : memref<2x256xf32, #tpu.memory_space<vmem>>, vector<2x256xf32>
    %c0_1 = arith.constant 0 : index
    %c0_2 = arith.constant 0 : index
    %1 = vector.load %arg2[%c0_1, %c0_2] : memref<1x256xf32, #tpu.memory_space<vmem>>, vector<1x256xf32>
    %2 = vector.broadcast %1 : vector<1x256xf32> to vector<2x256xf32>
    %3 = arith.addf %0, %2 : vector<2x256xf32>
    %c0_3 = arith.constant 0 : index
    %c0_4 = arith.constant 0 : index
    %4 = vector.load %arg3[%c0_3, %c0_4] : memref<2x256xf32, #tpu.memory_space<vmem>>, vector<2x256xf32>
    tpu.vector_store %arg3[%c0_3, %c0_4], %3 {strides = array<i32>} : memref<2x256xf32, #tpu.memory_space<vmem>>, vector<2x256xf32>,
    return
  }
  func.func @transform_0(%arg0: i32) -> (i32, i32) {
    %c0_i32 = arith.constant 0 : i32
    %c0_i32_0 = arith.constant 0 : i32
    return %c0_i32, %arg0 : i32, i32
  }
  func.func @transform_1(%arg0: i32) -> (i32, i32) {
    %c0_i32 = arith.constant 0 : i32
    %c0_i32_0 = arith.constant 0 : i32
    return %c0_i32, %arg0 : i32, i32
  }
  func.func @transform_2(%arg0: i32) -> (i32, i32) {
    %c0_i32 = arith.constant 0 : i32
    %c0_i32_0 = arith.constant 0 : i32
    return %c0_i32, %arg0 : i32, i32
  }
}

</mosaic_0001>

<llo_original>
// kernel: tpu_custom_call.1
$region0: #{tpu_custom_call.1}
  #allocation0 [shape = 'u32[]', space=smem, size = 0x4, offset = 0x4, fixed_abs, tag = 'smem constant byte address 0x4 - core index']
  #allocation1 [shape = 'u32[144,128]{1,0:T(1,128)}', space=vmem, size = 0x12000, scoped, tag = 'internal scratch']
  %s0 = inlined_call_operand.hbm [shape: f32[2,256], index: 0, kind: input, shape index: {}]
  %s1 = inlined_call_operand.vmem [shape: f32[1,256], index: 1, kind: input, shape index: {}]
  %s2 = inlined_call_operand.hbm [shape: f32[2,256], index: 2, kind: output, shape index: {}]
  %s3 = sld [smem:[#allocation0]]
  $region22: #{tpu_custom_call.1} parent=0
    _
  %s5 = ssub.s32 1, %s3
  %s6 = scalar_select 0, %s5, %s3
  $region1: #{tpu_custom_call.1} parent=0
    #allocation2 [shape = 'u8[2048]{0}', space=vmem, size = 0x800, scoped, tag = 'input window, operand 0, single buffered']
    #allocation3 [shape = 's32[1]{0}', space=sflag, size = 0x4, scoped, tag = 'scoped memory for tpu_custom_call.1']
    #allocation4 [shape = 's32[1]{0}', space=sflag, size = 0x4, scoped, tag = 'scoped memory for tpu_custom_call.1']
    #allocation5 [shape = 'u8[2048]{0}', space=vmem, size = 0x800, scoped, tag = 'output window, operand 0, single buffered']
    %7 = vsyncpa [#allocation3], 0
    %8 = vsyncpa [#allocation4], 0
    // Predicated region
    $region2: #{tpu_custom_call.1} parent=1 // pred_check
      _
    $region3: #{tpu_custom_call.1} parent=1 // pred_check_branch
      %10 = sbr.rel (0) target = $region5
    $region4: #{tpu_custom_call.1} parent=1 // pred_region
      %s12 = ssub.s32 64, 64
      %13 = vsyncadd [#allocation3], %s12
      %s15 = sshll.u32 [#allocation2], 4
      %s16 = int_to_ptr.vmem [resolvable:$true] %s15
      %18 = dma.hbm_to_vmem [thread:$0]  %s0, 64, %s16, [#allocation3]
    $region5: #{tpu_custom_call.1} parent=1 // pred_fallthru
      _
    // Predicated region
    $region6: #{tpu_custom_call.1} parent=1 // pred_check
      _
    $region7: #{tpu_custom_call.1} parent=1 // pred_check_branch
      %20 = sbr.rel (0) target = $region9
    $region8: #{tpu_custom_call.1} parent=1 // pred_region
      _
    $region9: #{tpu_custom_call.1} parent=1 // pred_fallthru
      _
    // Predicated region
    $region10: #{tpu_custom_call.1} parent=1 // pred_check
      _
    $region11: #{tpu_custom_call.1} parent=1 // pred_check_branch
      %22 = sbr.rel (0) target = $region13
    $region12: #{tpu_custom_call.1} parent=1 // pred_region
      %23 = dma.done [#allocation3], 64
    $region13: #{tpu_custom_call.1} parent=1 // pred_fallthru
      _
    %v24 = vld [vmem:[#allocation2] sm:$0xf]
    %v25 = vld [vmem:[%s1] sm:$0x3]
    %v27 = vlaneseq
    %v28 = vshrl.u32 %v27, 7
    %v29 = vsub.s32 0, %v28
    %v30 = vrot.slane %v25, %v29
    %v31 = vlaneseq
    %v32 = vshrl.u32 %v31, 7
    %v33 = vsub.s32 1, %v32
    %v34 = vrot.slane %v25, %v33
    %v35 = vcombine.low %v30, %v34
    %v37 = vunpack.c.l.s4 1983009808
    %v38 = vunpack.c.0.s8 %v37
    %v39 = vlaneseq
    %v40 = vshrl.u32 %v39, 7
    %v41 = vsub.s32 %v38, %v40
    %v42 = vrot.slane %v35, %v41
    %v44 = vadd.f32 %v24, %v42
    %45 = vst [vmem:[#allocation5] sm:$0xf] %v44
    // Predicated region
    $region14: #{tpu_custom_call.1} parent=1 // pred_check
      _
    $region15: #{tpu_custom_call.1} parent=1 // pred_check_branch
      %47 = sbr.rel (0) target = $region17
    $region16: #{tpu_custom_call.1} parent=1 // pred_region
      %s49 = ssub.s32 64, 64
      %50 = vsyncadd [#allocation4], %s49
      %s52 = sshll.u32 [#allocation5], 4
      %s53 = int_to_ptr.vmem [resolvable:$true] %s52
      %55 = dma.vmem_to_hbm [thread:$0]  %s53, 64, %s2, [#allocation4]
    $region17: #{tpu_custom_call.1} parent=1 // pred_fallthru
      _
    // Predicated region
    $region18: #{tpu_custom_call.1} parent=1 // pred_check
      _
    $region19: #{tpu_custom_call.1} parent=1 // pred_check_branch
      %57 = sbr.rel (0) target = $region21
    $region20: #{tpu_custom_call.1} parent=1 // pred_region
      %58 = dma.done [#allocation4], 64
    $region21: #{tpu_custom_call.1} parent=1 // pred_fallthru
      _
    %59 = vsyncpa [#allocation3], 1
    %60 = vsyncpa [#allocation4], 1

</llo_original>
